<compile_context>
chip_gen: v7x
topology: tpu7x:2x2x1
jax: 0.10.0
libtpu: 0.0.40
codegen_flags: <defaults>
</compile_context>

<pallas_src>
import jax
import jax.numpy as jnp
from jax.experimental import pallas as pl
from jax.experimental.pallas import tpu as pltpu


def _round_up(x: int, m: int) -> int:
    return (x + m - 1) // m * m


def _gru_cell_kernel(h_ref, wt_ref, b_ref, o_ref):
    """One batch tile of the NoInputGRUCell.

    h_ref : (TILE_B, Hp)    current hidden tile (native dtype)
    wt_ref: (Hp, 3*Hp)      fused, transposed, gate-blocked weight (resident)
    b_ref : (1, 3*Hp)       fused bias row (resident)
    o_ref : (TILE_B, Hp)    new hidden tile
    """
    hp = h_ref.shape[1]                      # static, multiple of 128
    h = h_ref[...]                           # native dtype -> MXU

    # One fused (TILE_B, Hp) x (Hp, 3Hp) matmul, f32 accumulation.
    y = jnp.dot(h, wt_ref[...], preferred_element_type=jnp.float32)
    y = y + b_ref[...].astype(jnp.float32)   # broadcast over sublanes

    # Gate slices are at 128-aligned lane boundaries (free).
    r = jax.nn.sigmoid(y[:, :hp])            # EUP
    z = jax.nn.sigmoid(y[:, hp:2 * hp])      # EUP
    n = jnp.tanh(r * y[:, 2 * hp:])          # EUP

    hf = h.astype(jnp.float32)
    # (1 - z) * n + z * h  ==  n + z * (h - n)
    o_ref[...] = (n + z * (hf - n)).astype(o_ref.dtype)


def no_input_gru_cell(h, weight, bias, *, tile_b=256):
    """h: (B, H). weight: (3H, H) (PyTorch nn.Linear layout). bias: (3H,)."""
    B, H = h.shape
    assert weight.shape == (3 * H, H)
    assert bias.shape == (3 * H,)

    dtype = h.dtype
    itemsize = jnp.dtype(dtype).itemsize

    # Lane-align hidden dim (128) and sublane-align the batch tile (8).
    Hp = _round_up(H, 128)
    tile_b = min(tile_b, _round_up(B, 8))
    Bp = _round_up(B, tile_b)

    # Fused gate-blocked weight layout: (Hp_in, 3*Hp_out), gate g occupies
    # lane-aligned columns [g*Hp, (g+1)*Hp). In real use this re-layout /
    # padding would be done once at parameter-init time.
    w3 = jnp.swapaxes(weight.reshape(3, H, H), 1, 2).astype(dtype)   # (3,Hin,Hout)
    w3p = jnp.pad(w3, ((0, 0), (0, Hp - H), (0, Hp - H)))            # (3,Hp,Hp)
    w_fused = jnp.transpose(w3p, (1, 0, 2)).reshape(Hp, 3 * Hp)      # (Hp,3Hp)

    b3p = jnp.pad(bias.reshape(3, H).astype(dtype),
                  ((0, 0), (0, Hp - H))).reshape(1, 3 * Hp)          # (1,3Hp)

    hp_in = jnp.pad(h, ((0, Bp - B), (0, Hp - H)))

    # VMEM budget: resident fused weight + bias, double-buffered h / o tiles,
    # and f32 gate intermediates — plus headroom. Clamp to a cross-gen range.
    vmem_bytes = (
        2 * 3 * (Hp * Hp + Hp) * itemsize   # weight + bias (buffering slack)
        + 2 * 2 * tile_b * Hp * itemsize    # double-buffered h / o tiles
        + 6 * tile_b * Hp * 4               # f32 intermediates (y, gates, blend)
    )
    vmem_limit = int(min(max(2 * vmem_bytes, 32 * 1024 * 1024),
                         64 * 1024 * 1024))

    out = pl.pallas_call(
        _gru_cell_kernel,
        out_shape=jax.ShapeDtypeStruct((Bp, Hp), dtype),
        grid=(Bp // tile_b,),
        in_specs=[
            pl.BlockSpec((tile_b, Hp), lambda i: (i, 0)),     # batch-tiled h
            pl.BlockSpec((Hp, 3 * Hp), lambda i: (0, 0)),     # resident fused W^T
            pl.BlockSpec((1, 3 * Hp), lambda i: (0, 0)),      # resident bias
        ],
        out_specs=pl.BlockSpec((tile_b, Hp), lambda i: (i, 0)),
        compiler_params=pltpu.CompilerParams(
            dimension_semantics=("parallel",),
            vmem_limit_bytes=vmem_limit,
        ),
    )(hp_in, w_fused, b3p)

    return out[:B, :H]


def _reference(h, weight, bias):
    y = h @ weight.T + bias
    H = h.shape[1]
    r = jax.nn.sigmoid(y[:, :H])
    z = jax.nn.sigmoid(y[:, H:2 * H])
    n = jnp.tanh(r * y[:, 2 * H:])
    return (1.0 - z) * n + z * h


if __name__ == "__main__":
    B, H = 8, 32

    key = jax.random.PRNGKey(0)
    k_h, k_w, k_b = jax.random.split(key, 3)

    # Deterministic "Linear(H, 3H)" parameters (PyTorch-style uniform init).
    bound = 1.0 / jnp.sqrt(jnp.float32(H))
    h = jax.random.normal(k_h, (B, H), dtype=jnp.float32)
    weight = jax.random.uniform(k_w, (3 * H, H), dtype=jnp.float32,
                                minval=-bound, maxval=bound)
    bias = jax.random.uniform(k_b, (3 * H,), dtype=jnp.float32,
                              minval=-bound, maxval=bound)

    out = no_input_gru_cell(h, weight, bias)
    out = jax.block_until_ready(out)

    ref = _reference(h, weight, bias)
    assert out.shape == (B, H)
    assert jnp.allclose(out, ref, atol=1e-5, rtol=1e-5), "mismatch vs reference"

    print("KERNEL_OK")
</pallas_src>

<mosaic_0001>
module attributes {stable_mosaic.version = 11 : i64} {
  func.func @_gru_cell_kernel(%arg0: i32, %arg1: memref<8x128xf32, #tpu.memory_space<vmem>>, %arg2: memref<128x384xf32, #tpu.memory_space<vmem>>, %arg3: memref<1x384xf32, #tpu.memory_space<vmem>>, %arg4: memref<8x128xf32, #tpu.memory_space<vmem>>) attributes {dimension_semantics = [#tpu.dimension_semantics<parallel>], iteration_bounds = array<i64: 1>, scalar_prefetch = 0 : i64, scratch_operands = 0 : i64, tpu.core_type = #tpu.core_type<tc>, window_params = [{transform_indices = @transform_0, window_bounds = array<i64: 8, 128>}, {pipeline_mode = #tpu.pipeline_mode<synchronous>, transform_indices = @transform_1, window_bounds = array<i64: 128, 384>}, {pipeline_mode = #tpu.pipeline_mode<synchronous>, transform_indices = @transform_2, window_bounds = array<i64: 1, 384>}, {transform_indices = @transform_3, window_bounds = array<i64: 8, 128>}]} {
    %c0 = arith.constant 0 : index
    %c0_0 = arith.constant 0 : index
    %0 = vector.load %arg1[%c0, %c0_0] : memref<8x128xf32, #tpu.memory_space<vmem>>, vector<8x128xf32>
    %c0_1 = arith.constant 0 : index
    %c0_2 = arith.constant 0 : index
    %1 = vector.load %arg2[%c0_1, %c0_2] : memref<128x384xf32, #tpu.memory_space<vmem>>, vector<128x384xf32>
    %cst = arith.constant dense<0.000000e+00> : vector<8x384xf32>
    %2 = tpu.matmul %0, %1, %cst {dimension_numbers = #tpu.dot_dimension_numbers<[1], [0], [0], [1], [0, 0, 1, 1], [], []>} : vector<8x128xf32>, vector<128x384xf32>, vector<8x384xf32> -> vector<8x384xf32>
    %c0_3 = arith.constant 0 : index
    %c0_4 = arith.constant 0 : index
    %3 = vector.load %arg3[%c0_3, %c0_4] : memref<1x384xf32, #tpu.memory_space<vmem>>, vector<1x384xf32>
    %4 = vector.broadcast %3 : vector<1x384xf32> to vector<8x384xf32>
    %5 = arith.addf %2, %4 : vector<8x384xf32>
    %6 = vector.extract_strided_slice %5 {offsets = [0, 0], sizes = [8, 128], strides = [1, 1]} : vector<8x384xf32> to vector<8x128xf32>
    %7 = arith.negf %6 : vector<8x128xf32>
    %8 = math.exp %7 : vector<8x128xf32>
    %cst_5 = arith.constant 1.000000e+00 : f32
    %9 = vector.broadcast %cst_5 : f32 to vector<8x128xf32>
    %10 = arith.addf %9, %8 : vector<8x128xf32>
    %11 = arith.divf %9, %10 : vector<8x128xf32>
    %12 = vector.extract_strided_slice %5 {offsets = [0, 128], sizes = [8, 128], strides = [1, 1]} : vector<8x384xf32> to vector<8x128xf32>
    %13 = arith.negf %12 : vector<8x128xf32>
    %14 = math.exp %13 : vector<8x128xf32>
    %cst_6 = arith.constant 1.000000e+00 : f32
    %15 = vector.broadcast %cst_6 : f32 to vector<8x128xf32>
    %16 = arith.addf %15, %14 : vector<8x128xf32>
    %17 = arith.divf %15, %16 : vector<8x128xf32>
    %18 = vector.extract_strided_slice %5 {offsets = [0, 256], sizes = [8, 128], strides = [1, 1]} : vector<8x384xf32> to vector<8x128xf32>
    %19 = arith.mulf %11, %18 : vector<8x128xf32>
    %20 = math.tanh %19 : vector<8x128xf32>
    %21 = arith.subf %0, %20 : vector<8x128xf32>
    %22 = arith.mulf %17, %21 : vector<8x128xf32>
    %23 = arith.addf %20, %22 : vector<8x128xf32>
    %c0_7 = arith.constant 0 : index
    %c0_8 = arith.constant 0 : index
    %24 = vector.load %arg4[%c0_7, %c0_8] : memref<8x128xf32, #tpu.memory_space<vmem>>, vector<8x128xf32>
    tpu.vector_store %arg4[%c0_7, %c0_8], %23 {strides = array<i32>} : memref<8x128xf32, #tpu.memory_space<vmem>>, vector<8x128xf32>,
    return
  }
  func.func @transform_0(%arg0: i32) -> (i32, i32) {
    %c0_i32 = arith.constant 0 : i32
    %c0_i32_0 = arith.constant 0 : i32
    return %arg0, %c0_i32 : i32, i32
  }
  func.func @transform_1(%arg0: i32) -> (i32, i32) {
    %c0_i32 = arith.constant 0 : i32
    %c0_i32_0 = arith.constant 0 : i32
    %c0_i32_1 = arith.constant 0 : i32
    return %c0_i32, %c0_i32_0 : i32, i32
  }
  func.func @transform_2(%arg0: i32) -> (i32, i32) {
    %c0_i32 = arith.constant 0 : i32
    %c0_i32_0 = arith.constant 0 : i32
    %c0_i32_1 = arith.constant 0 : i32
    return %c0_i32, %c0_i32_0 : i32, i32
  }
  func.func @transform_3(%arg0: i32) -> (i32, i32) {
    %c0_i32 = arith.constant 0 : i32
    %c0_i32_0 = arith.constant 0 : i32
    return %arg0, %c0_i32 : i32, i32
  }
}

</mosaic_0001>

<llo_original>
// kernel: tpu_custom_call.1
$region0: #{tpu_custom_call.1}
  #allocation0 [shape = 'u32[]', space=smem, size = 0x4, offset = 0x4, fixed_abs, tag = 'smem constant byte address 0x4 - core index']
  #allocation1 [shape = 'u32[144,128]{1,0:T(1,128)}', space=vmem, size = 0x12000, scoped, tag = 'internal scratch']
  %s0 = inlined_call_operand.hbm [shape: f32[8,128], index: 0, kind: input, shape index: {}]
  %s1 = inlined_call_operand.hbm [shape: f32[128,384], index: 1, kind: input, shape index: {}]
  %s2 = inlined_call_operand.vmem [shape: f32[1,384], index: 2, kind: input, shape index: {}]
  %s3 = inlined_call_operand.hbm [shape: f32[8,128], index: 3, kind: output, shape index: {}]
  %s4 = sld [smem:[#allocation0]]
  $region30: #{tpu_custom_call.1} parent=0
    _
  %s6 = ssub.s32 1, %s4
  %s7 = scalar_select 0, %s6, %s4
  $region1: #{tpu_custom_call.1} parent=0
    #allocation2 [shape = 'u8[4096]{0}', space=vmem, size = 0x1000, scoped, tag = 'input window, operand 0, single buffered']
    #allocation3 [shape = 's32[1]{0}', space=sflag, size = 0x4, scoped, tag = 'scoped memory for tpu_custom_call.1']
    #allocation4 [shape = 's32[1]{0}', space=sflag, size = 0x4, scoped, tag = 'scoped memory for tpu_custom_call.1']
    #allocation5 [shape = 'u8[196608]{0}', space=vmem, size = 0x30000, scoped, tag = 'input window, operand 1, single buffered']
    #allocation6 [shape = 's32[1]{0}', space=sflag, size = 0x4, scoped, tag = 'scoped memory for tpu_custom_call.1']
    #allocation7 [shape = 'u8[4096]{0}', space=vmem, size = 0x1000, scoped, tag = 'output window, operand 0, single buffered']
    %8 = vsyncpa [#allocation3], 0
    %9 = vsyncpa [#allocation6], 0
    %10 = vsyncpa [#allocation4], 0
    // Predicated region
    $region2: #{tpu_custom_call.1} parent=1 // pred_check
      _
    $region3: #{tpu_custom_call.1} parent=1 // pred_check_branch
      %12 = sbr.rel (0) target = $region5
    $region4: #{tpu_custom_call.1} parent=1 // pred_region
      %s14 = ssub.s32 128, 128
      %15 = vsyncadd [#allocation3], %s14
      %s17 = sshll.u32 [#allocation2], 4
      %s18 = int_to_ptr.vmem [resolvable:$true] %s17
      %20 = dma.hbm_to_vmem [thread:$0]  %s0, 128, %s18, [#allocation3]
    $region5: #{tpu_custom_call.1} parent=1 // pred_fallthru
      _
    // Predicated region
    $region6: #{tpu_custom_call.1} parent=1 // pred_check
      _
    $region7: #{tpu_custom_call.1} parent=1 // pred_check_branch
      %22 = sbr.rel (0) target = $region9
    $region8: #{tpu_custom_call.1} parent=1 // pred_region
      %s24 = ssub.s32 6144, 6144
      %25 = vsyncadd [#allocation6], %s24
      %s26 = sshll.u32 [#allocation5], 4
      %s27 = int_to_ptr.vmem [resolvable:$true] %s26
      %32 = dma.hbm_to_vmem [thread:$0]  %s1, 6144, %s27, [#allocation6], 384, 384, 24
    $region9: #{tpu_custom_call.1} parent=1 // pred_fallthru
      _
    // Predicated region
    $region10: #{tpu_custom_call.1} parent=1 // pred_check
      _
    $region11: #{tpu_custom_call.1} parent=1 // pred_check_branch
      %34 = sbr.rel (0) target = $region13
    $region12: #{tpu_custom_call.1} parent=1 // pred_region
      _
    $region13: #{tpu_custom_call.1} parent=1 // pred_fallthru
      _
    // Predicated region
    $region14: #{tpu_custom_call.1} parent=1 // pred_check
      _
    $region15: #{tpu_custom_call.1} parent=1 // pred_check_branch
      %36 = sbr.rel (0) target = $region17
    $region16: #{tpu_custom_call.1} parent=1 // pred_region
      %37 = dma.done [#allocation3], 128
    $region17: #{tpu_custom_call.1} parent=1 // pred_fallthru
      _
    // Predicated region
    $region18: #{tpu_custom_call.1} parent=1 // pred_check
      _
    $region19: #{tpu_custom_call.1} parent=1 // pred_check_branch
      %39 = sbr.rel (0) target = $region21
    $region20: #{tpu_custom_call.1} parent=1 // pred_region
      %40 = dma.done [#allocation6], 6144
    $region21: #{tpu_custom_call.1} parent=1 // pred_fallthru
      _
    %v41 = vld [vmem:[#allocation2] sm:$0xff]
    %v42 = vld [vmem:[#allocation5] sm:$0xff]
    %v43 = vld [vmem:[#allocation5 + $0x8] sm:$0xff]
    %v44 = vld [vmem:[#allocation5 + $0x10] sm:$0xff]
    %v45 = vld [vmem:[#allocation5 + $0x18] sm:$0xff]
    %v46 = vld [vmem:[#allocation5 + $0x20] sm:$0xff]
    %v47 = vld [vmem:[#allocation5 + $0x28] sm:$0xff]
    %v48 = vld [vmem:[#allocation5 + $0x30] sm:$0xff]
    %v49 = vld [vmem:[#allocation5 + $0x38] sm:$0xff]
    %v50 = vld [vmem:[#allocation5 + $0x40] sm:$0xff]
    %v51 = vld [vmem:[#allocation5 + $0x48] sm:$0xff]
    %v52 = vld [vmem:[#allocation5 + $0x50] sm:$0xff]
    %v53 = vld [vmem:[#allocation5 + $0x58] sm:$0xff]
    %v54 = vld [vmem:[#allocation5 + $0x60] sm:$0xff]
    %v55 = vld [vmem:[#allocation5 + $0x68] sm:$0xff]
    %v56 = vld [vmem:[#allocation5 + $0x70] sm:$0xff]
    %v57 = vld [vmem:[#allocation5 + $0x78] sm:$0xff]
    %v58 = vld [vmem:[#allocation5 + $0x80] sm:$0xff]
    %v59 = vld [vmem:[#allocation5 + $0x88] sm:$0xff]
    %v60 = vld [vmem:[#allocation5 + $0x90] sm:$0xff]
    %v61 = vld [vmem:[#allocation5 + $0x98] sm:$0xff]
    %v62 = vld [vmem:[#allocation5 + $0xa0] sm:$0xff]
    %v63 = vld [vmem:[#allocation5 + $0xa8] sm:$0xff]
    %v64 = vld [vmem:[#allocation5 + $0xb0] sm:$0xff]
    %v65 = vld [vmem:[#allocation5 + $0xb8] sm:$0xff]
    %v66 = vld [vmem:[#allocation5 + $0xc0] sm:$0xff]
    %v67 = vld [vmem:[#allocation5 + $0xc8] sm:$0xff]
    %v68 = vld [vmem:[#allocation5 + $0xd0] sm:$0xff]
    %v69 = vld [vmem:[#allocation5 + $0xd8] sm:$0xff]
    %v70 = vld [vmem:[#allocation5 + $0xe0] sm:$0xff]
    %v71 = vld [vmem:[#allocation5 + $0xe8] sm:$0xff]
    %v72 = vld [vmem:[#allocation5 + $0xf0] sm:$0xff]
    %v73 = vld [vmem:[#allocation5 + $0xf8] sm:$0xff]
    %v74 = vld [vmem:[#allocation5 + $0x100] sm:$0xff]
    %v75 = vld [vmem:[#allocation5 + $0x108] sm:$0xff]
    %v76 = vld [vmem:[#allocation5 + $0x110] sm:$0xff]
    %v77 = vld [vmem:[#allocation5 + $0x118] sm:$0xff]
    %v78 = vld [vmem:[#allocation5 + $0x120] sm:$0xff]
    %v79 = vld [vmem:[#allocation5 + $0x128] sm:$0xff]
    %v80 = vld [vmem:[#allocation5 + $0x130] sm:$0xff]
    %v81 = vld [vmem:[#allocation5 + $0x138] sm:$0xff]
    %v82 = vld [vmem:[#allocation5 + $0x140] sm:$0xff]
    %v83 = vld [vmem:[#allocation5 + $0x148] sm:$0xff]
    %v84 = vld [vmem:[#allocation5 + $0x150] sm:$0xff]
    %v85 = vld [vmem:[#allocation5 + $0x158] sm:$0xff]
    %v86 = vld [vmem:[#allocation5 + $0x160] sm:$0xff]
    %v87 = vld [vmem:[#allocation5 + $0x168] sm:$0xff]
    %v88 = vld [vmem:[#allocation5 + $0x170] sm:$0xff]
    %v89 = vld [vmem:[#allocation5 + $0x178] sm:$0xff]
    %v90 = vld [vmem:[%s2] sm:$0x7]
    %v92 = vlaneseq
    %v93 = vshrl.u32 %v92, 7
    %v94 = vsub.s32 0, %v93
    %v95 = vrot.slane %v90, %v94
    %v96 = vlaneseq
    %v97 = vshrl.u32 %v96, 7
    %v98 = vsub.s32 1, %v97
    %v99 = vrot.slane %v90, %v98
    %v100 = vlaneseq
    %v101 = vshrl.u32 %v100, 7
    %v102 = vsub.s32 2, %v101
    %v103 = vrot.slane %v90, %v102
    %107 = vmatprep.subr.mxu0 %v43
    %108 = vmatpush1.msra.mxu0 %v42
    %109 = vmatprep.subr.mxu0 %v46
    %110 = vmatpush1.msra.mxu0 %v45
    %111 = vmatprep.subr.mxu0 %v49
    %112 = vmatpush1.msra.mxu0 %v48
    %113 = vmatprep.subr.mxu0 %v52
    %114 = vmatpush1.msra.mxu0 %v51
    %115 = vmatprep.subr.mxu0 %v55
    %116 = vmatpush1.msra.mxu0 %v54
    %117 = vmatprep.subr.mxu0 %v58
    %118 = vmatpush1.msra.mxu0 %v57
    %119 = vmatprep.subr.mxu0 %v61
    %120 = vmatpush1.msra.mxu0 %v60
    %121 = vmatprep.subr.mxu0 %v64
    %122 = vmatpush1.msra.mxu0 %v63
    %123 = vmatprep.subr.mxu0 %v67
    %124 = vmatpush1.msra.mxu0 %v66
    %125 = vmatprep.subr.mxu0 %v70
    %126 = vmatpush1.msra.mxu0 %v69
    %127 = vmatprep.subr.mxu0 %v73
    %128 = vmatpush1.msra.mxu0 %v72
    %129 = vmatprep.subr.mxu0 %v76
    %130 = vmatpush1.msra.mxu0 %v75
    %131 = vmatprep.subr.mxu0 %v79
    %132 = vmatpush1.msra.mxu0 %v78
    %133 = vmatprep.subr.mxu0 %v82
    %134 = vmatpush1.msra.mxu0 %v81
    %135 = vmatprep.subr.mxu0 %v85
    %136 = vmatpush1.msra.mxu0 %v84
    %137 = vmatprep.subr.mxu0 %v88
    %138 = vmatpush1.msra.mxu0 %v87
    %139 = vmatprep.subr.mxu0 0.0
    %140 = vmatpush1.msra.mxu0 0.0
    %141 = vmatprep.subr.mxu0 0.0
    %142 = vmatpush1.msra.mxu0 0.0
    %143 = vmatprep.subr.mxu0 0.0
    %144 = vmatpush1.msra.mxu0 0.0
    %145 = vmatprep.subr.mxu0 0.0
    %146 = vmatpush1.msra.mxu0 0.0
    %147 = vmatprep.subr.mxu0 0.0
    %148 = vmatpush1.msra.mxu0 0.0
    %149 = vmatprep.subr.mxu0 0.0
    %150 = vmatpush1.msra.mxu0 0.0
    %151 = vmatprep.subr.mxu0 0.0
    %152 = vmatpush1.msra.mxu0 0.0
    %153 = vmatprep.subr.mxu0 0.0
    %154 = vmatpush1.msra.mxu0 0.0
    %155 = vmatprep.subr.mxu0 0.0
    %156 = vmatpush1.msra.mxu0 0.0
    %157 = vmatprep.subr.mxu0 0.0
    %158 = vmatpush1.msra.mxu0 0.0
    %159 = vmatprep.subr.mxu0 0.0
    %160 = vmatpush1.msra.mxu0 0.0
    %161 = vmatprep.subr.mxu0 0.0
    %162 = vmatpush1.msra.mxu0 0.0
    %163 = vmatprep.subr.mxu0 0.0
    %164 = vmatpush1.msra.mxu0 0.0
    %165 = vmatprep.subr.mxu0 0.0
    %166 = vmatpush1.msra.mxu0 0.0
    %167 = vmatprep.subr.mxu0 0.0
    %168 = vmatpush1.msra.mxu0 0.0
    %169 = vmatprep.subr.mxu0 0.0
    %170 = vmatpush1.msra.mxu0 0.0
    %171 = vmatprep.mubr.f32.mxu0 0.0
    %172 = vmatmul.mubr.f32.gmra.mrb[0].mxu0 %v41
    %v173 = vpop.f32.mrb[0].mxu0
    %v174 = vadd.f32 %v95, %v173
    %v175 = vpop.f32.mrb[0].mxu0
    %v176 = vadd.f32 %v99, %v175
    %177 = vdwg.mxu0
    %178 = vmatprep.subr.mxu0 0.0
    %179 = vmatpush1.msra.mxu0 %v44
    %180 = vmatprep.subr.mxu0 0.0
    %181 = vmatpush1.msra.mxu0 %v47
    %182 = vmatprep.subr.mxu0 0.0
    %183 = vmatpush1.msra.mxu0 %v50
    %184 = vmatprep.subr.mxu0 0.0
    %185 = vmatpush1.msra.mxu0 %v53
    %186 = vmatprep.subr.mxu0 0.0
    %187 = vmatpush1.msra.mxu0 %v56
    %188 = vmatprep.subr.mxu0 0.0
    %189 = vmatpush1.msra.mxu0 %v59
    %190 = vmatprep.subr.mxu0 0.0
    %191 = vmatpush1.msra.mxu0 %v62
    %192 = vmatprep.subr.mxu0 0.0
    %193 = vmatpush1.msra.mxu0 %v65
    %194 = vmatprep.subr.mxu0 0.0
    %195 = vmatpush1.msra.mxu0 %v68
    %196 = vmatprep.subr.mxu0 0.0
    %197 = vmatpush1.msra.mxu0 %v71
    %198 = vmatprep.subr.mxu0 0.0
    %199 = vmatpush1.msra.mxu0 %v74
    %200 = vmatprep.subr.mxu0 0.0
    %201 = vmatpush1.msra.mxu0 %v77
    %202 = vmatprep.subr.mxu0 0.0
    %203 = vmatpush1.msra.mxu0 %v80
    %204 = vmatprep.subr.mxu0 0.0
    %205 = vmatpush1.msra.mxu0 %v83
    %206 = vmatprep.subr.mxu0 0.0
    %207 = vmatpush1.msra.mxu0 %v86
    %208 = vmatprep.subr.mxu0 0.0
    %209 = vmatpush1.msra.mxu0 %v89
    %210 = vmatprep.subr.mxu0 0.0
    %211 = vmatpush1.msra.mxu0 0.0
    %212 = vmatprep.subr.mxu0 0.0
    %213 = vmatpush1.msra.mxu0 0.0
    %214 = vmatprep.subr.mxu0 0.0
    %215 = vmatpush1.msra.mxu0 0.0
    %216 = vmatprep.subr.mxu0 0.0
    %217 = vmatpush1.msra.mxu0 0.0
    %218 = vmatprep.subr.mxu0 0.0
    %219 = vmatpush1.msra.mxu0 0.0
    %220 = vmatprep.subr.mxu0 0.0
    %221 = vmatpush1.msra.mxu0 0.0
    %222 = vmatprep.subr.mxu0 0.0
    %223 = vmatpush1.msra.mxu0 0.0
    %224 = vmatprep.subr.mxu0 0.0
    %225 = vmatpush1.msra.mxu0 0.0
    %226 = vmatprep.subr.mxu0 0.0
    %227 = vmatpush1.msra.mxu0 0.0
    %228 = vmatprep.subr.mxu0 0.0
    %229 = vmatpush1.msra.mxu0 0.0
    %230 = vmatprep.subr.mxu0 0.0
    %231 = vmatpush1.msra.mxu0 0.0
    %232 = vmatprep.subr.mxu0 0.0
    %233 = vmatpush1.msra.mxu0 0.0
    %234 = vmatprep.subr.mxu0 0.0
    %235 = vmatpush1.msra.mxu0 0.0
    %236 = vmatprep.subr.mxu0 0.0
    %237 = vmatpush1.msra.mxu0 0.0
    %238 = vmatprep.subr.mxu0 0.0
    %239 = vmatpush1.msra.mxu0 0.0
    %240 = vmatprep.subr.mxu0 0.0
    %241 = vmatpush1.msra.mxu0 0.0
    %242 = vmatprep.mubr.f32.mxu0 0.0
    %243 = vmatmul.mubr.f32.gmra.mrb[0].mxu0 %v41
    %v244 = vpop.f32.mrb[0].mxu0
    %v245 = vadd.f32 %v103, %v244
    %v246 = vpop.f32.mrb[0].mxu0
    %247 = vdwg.mxu0
    %v248 = vxor.u32 %v174, 2147483648
    %v249 = vmul.f32 %v248, 1.442695
    %v250 = vpow.pop %v249
    %v251 = vadd.f32 %v250, 1.0
    %v252 = vrcp.pop %v251
    %v253 = vmul.f32 1.0, %v252
    %v254 = vxor.u32 %v176, 2147483648
    %v255 = vmul.f32 %v254, 1.442695
    %v256 = vpow.pop %v255
    %v257 = vadd.f32 %v256, 1.0
    %v258 = vrcp.pop %v257
    %v259 = vmul.f32 1.0, %v258
    %v260 = vmul.f32 %v253, %v245
    %v261 = vtanh.pop %v260
    %v262 = vsub.f32 %v41, %v261
    %v263 = vmul.f32 %v259, %v262
    %v264 = vadd.f32 %v261, %v263
    %265 = vst [vmem:[#allocation7] sm:$0xff] %v264
    // Predicated region
    $region22: #{tpu_custom_call.1} parent=1 // pred_check
      _
    $region23: #{tpu_custom_call.1} parent=1 // pred_check_branch
      %267 = sbr.rel (0) target = $region25
    $region24: #{tpu_custom_call.1} parent=1 // pred_region
      %s269 = ssub.s32 128, 128
      %270 = vsyncadd [#allocation4], %s269
      %s272 = sshll.u32 [#allocation7], 4
      %s273 = int_to_ptr.vmem [resolvable:$true] %s272
      %275 = dma.vmem_to_hbm [thread:$0]  %s273, 128, %s3, [#allocation4]
    $region25: #{tpu_custom_call.1} parent=1 // pred_fallthru
      _
    // Predicated region
    $region26: #{tpu_custom_call.1} parent=1 // pred_check
      _
    $region27: #{tpu_custom_call.1} parent=1 // pred_check_branch
      %277 = sbr.rel (0) target = $region29
    $region28: #{tpu_custom_call.1} parent=1 // pred_region
      %278 = dma.done [#allocation4], 128
    $region29: #{tpu_custom_call.1} parent=1 // pred_fallthru
      _
    %279 = vsyncpa [#allocation3], 1
    %280 = vsyncpa [#allocation6], 1
    %281 = vsyncpa [#allocation4], 1

</llo_original>
